<compile_context>
chip_gen: v7x
topology: tpu7x:2x2x1
jax: 0.10.0
libtpu: 0.0.40
codegen_flags: <defaults>
</compile_context>

<pallas_src>
import functools

import jax
import jax.numpy as jnp
from jax.experimental import pallas as pl
from jax.experimental.pallas import tpu as pltpu


def _round_up(x, m):
    return (x + m - 1) // m * m


def _both_attention_kernel(
    h_ref,
    senc_ref, slin_ref, smask_ref,
    eenc_ref, elin_ref, emask_ref,
    nenc_ref, nlin_ref, nmask_ref,
    ws_ref, we_ref, wn_ref, wh_ref,
    out_ref,
    *, H, Ls, Le, Ln, out_pad,
):
    f32 = jnp.float32
    h = h_ref[...].astype(f32)                               # (bb, H)

    def attend(lin_ref, enc_ref, mask_ref):
        lin = lin_ref[...].astype(f32)                       # (bb, L, H)
        enc = enc_ref[...].astype(f32)                       # (bb, L, D)
        # scores[b, l] = <lin[b, l, :], h[b, :]>  (VPU mul + lane reduce)
        scores = jnp.sum(lin * h[:, None, :], axis=-1)       # (bb, L)
        # masked_fill(mask == 1, -inf) parity (fully-masked rows -> NaN, as torch)
        scores = jnp.where(mask_ref[...] > 0, -jnp.inf, scores)
        m = jnp.max(scores, axis=-1, keepdims=True)
        e = jnp.exp(scores - m)
        denom = jnp.sum(e, axis=-1, keepdims=True)
        inv = pl.reciprocal(denom, approx=True)               # EUP slot
        inv = inv * (2.0 - denom * inv)                       # one Newton step -> ~f32 acc
        alpha = e * inv
        ctx = jnp.sum(alpha[:, :, None] * enc, axis=1)        # (bb, D) sublane reduce
        return alpha, ctx

    src_alpha, src_ctx = attend(slin_ref, senc_ref, smask_ref)
    edit_alpha, edit_ctx = attend(elin_ref, eenc_ref, emask_ref)
    node_alpha, node_ctx = attend(nlin_ref, nenc_ref, nmask_ref)

    # att_vec_linear(concat([ctx_s, ctx_e, ctx_n, h])) as four accumulated MXU
    # matmuls against the pre-split weight row blocks (no cat scratch round-trip).
    pre = jnp.dot(src_ctx, ws_ref[...].astype(f32), preferred_element_type=f32)
    pre += jnp.dot(edit_ctx, we_ref[...].astype(f32), preferred_element_type=f32)
    pre += jnp.dot(node_ctx, wn_ref[...].astype(f32), preferred_element_type=f32)
    pre += jnp.dot(h, wh_ref[...].astype(f32), preferred_element_type=f32)

    # Packed, lane-padded output slab: [att_t | src_a | edit_a | node_a | 0-pad].
    out_ref[:, :H] = jnp.tanh(pre).astype(out_ref.dtype)
    out_ref[:, H:H + Ls] = src_alpha.astype(out_ref.dtype)
    out_ref[:, H + Ls:H + Ls + Le] = edit_alpha.astype(out_ref.dtype)
    out_ref[:, H + Ls + Le:H + Ls + Le + Ln] = node_alpha.astype(out_ref.dtype)
    if out_pad:
        out_ref[:, H + Ls + Le + Ln:] = jnp.zeros(
            (out_ref.shape[0], out_pad), out_ref.dtype)


def both_attention(
    h_t,
    src_encodings, src_encodings_att_linear,
    edit_encodings, edit_encodings_att_linear,
    node_encodings, node_encodings_att_linear,
    src_sent_masks, edit_sent_masks, node_sent_masks,
    att_vec_weight,            # (H, Ds+De+Dn+H) — torch nn.Linear weight layout
    *, vmem_budget_bytes=12 * 1024 * 1024,
):
    B, H = h_t.shape
    Ls, Ds = src_encodings.shape[1], src_encodings.shape[2]
    Le, De = edit_encodings.shape[1], edit_encodings.shape[2]
    Ln, Dn = node_encodings.shape[1], node_encodings.shape[2]
    Ltot = Ls + Le + Ln
    Din = Ds + De + Dn + H
    f32 = jnp.float32

    # Lane-dense packed output width (multiple of 128); sliced back in wrapper.
    Wout = _round_up(H + Ltot, 128)
    out_pad = Wout - (H + Ltot)

    # Tiny wrapper-side work: transpose + row-split of the (H, Din) weight so
    # the kernel never slices the weight ref at unaligned sublane offsets.
    w_t = att_vec_weight.T.astype(f32)                         # (Din, H)
    w_s = w_t[:Ds]
    w_e = w_t[Ds:Ds + De]
    w_n = w_t[Ds + De:Ds + De + Dn]
    w_h = w_t[Ds + De + Dn:]

    def isz(a):
        return jnp.dtype(a.dtype).itemsize

    # Double-buffered per-row VMEM footprint (inputs + packed output).
    row_bytes = 2 * (
        H * isz(h_t)
        + Ls * H * isz(src_encodings_att_linear)
        + Le * H * isz(edit_encodings_att_linear)
        + Ln * H * isz(node_encodings_att_linear)
        + Ls * Ds * isz(src_encodings)
        + Le * De * isz(edit_encodings)
        + Ln * Dn * isz(node_encodings)
        + Ls * isz(src_sent_masks)
        + Le * isz(edit_sent_masks)
        + Ln * isz(node_sent_masks)
        + Wout * 4
    )
    max_bb = max(8, (vmem_budget_bytes // row_bytes) // 8 * 8)
    if B <= 8:
        bb = B                     # single full-dim block
    else:
        # >= 2 grid steps so the "parallel" axis can feed both v7x TensorCores,
        # bounded by the VMEM budget (fits v5e 16 MiB scoped / v7x 64 MiB phys).
        bb = max(8, min(_round_up(pl.cdiv(B, 2), 8), max_bb, 512))
    grid = (pl.cdiv(B, bb),)

    w_bytes = 2 * Din * H * 4
    vmem_limit = int(min(48 << 20,
                         max(16 << 20, bb * row_bytes + w_bytes + (2 << 20))))

    kernel = functools.partial(
        _both_attention_kernel, H=H, Ls=Ls, Le=Le, Ln=Ln, out_pad=out_pad)

    out = pl.pallas_call(
        kernel,
        out_shape=jax.ShapeDtypeStruct((B, Wout), f32),
        grid=grid,
        in_specs=[
            pl.BlockSpec((bb, H), lambda b: (b, 0)),               # h_t
            pl.BlockSpec((bb, Ls, Ds), lambda b: (b, 0, 0)),       # src_encodings
            pl.BlockSpec((bb, Ls, H), lambda b: (b, 0, 0)),        # src att-linear
            pl.BlockSpec((bb, Ls), lambda b: (b, 0)),              # src mask
            pl.BlockSpec((bb, Le, De), lambda b: (b, 0, 0)),       # edit_encodings
            pl.BlockSpec((bb, Le, H), lambda b: (b, 0, 0)),        # edit att-linear
            pl.BlockSpec((bb, Le), lambda b: (b, 0)),              # edit mask
            pl.BlockSpec((bb, Ln, Dn), lambda b: (b, 0, 0)),       # node_encodings
            pl.BlockSpec((bb, Ln, H), lambda b: (b, 0, 0)),        # node att-linear
            pl.BlockSpec((bb, Ln), lambda b: (b, 0)),              # node mask
            # Block-invariant weight row blocks: constant block index across the
            # grid, so the pipeline does not re-DMA them per step.
            pl.BlockSpec((Ds, H), lambda b: (0, 0)),
            pl.BlockSpec((De, H), lambda b: (0, 0)),
            pl.BlockSpec((Dn, H), lambda b: (0, 0)),
            pl.BlockSpec((H, H), lambda b: (0, 0)),
        ],
        out_specs=pl.BlockSpec((bb, Wout), lambda b: (b, 0)),
        compiler_params=pltpu.CompilerParams(
            dimension_semantics=("parallel",),          # 2nd TC on v7x
            vmem_limit_bytes=vmem_limit),
    )(
        h_t,
        src_encodings, src_encodings_att_linear, src_sent_masks,
        edit_encodings, edit_encodings_att_linear, edit_sent_masks,
        node_encodings, node_encodings_att_linear, node_sent_masks,
        w_s, w_e, w_n, w_h,
    )

    att_t = out[:, :H]
    src_alpha = out[:, H:H + Ls]
    edit_alpha = out[:, H + Ls:H + Ls + Le]
    node_alpha = out[:, H + Ls + Le:H + Ltot]
    return att_t, src_alpha, edit_alpha, node_alpha


def _reference(h_t, senc, slin, eenc, elin, nenc, nlin, sm, em, nm, w):
    def attend(enc, lin, mask):
        scores = jnp.einsum("blh,bh->bl", lin, h_t)
        scores = jnp.where(mask > 0, -jnp.inf, scores)
        alpha = jax.nn.softmax(scores, axis=-1)
        ctx = jnp.einsum("bl,bld->bd", alpha, enc)
        return ctx, alpha

    sc, sa = attend(senc, slin, sm)
    ec, ea = attend(eenc, elin, em)
    nc, na = attend(nenc, nlin, nm)
    att = jnp.tanh(jnp.concatenate([sc, ec, nc, h_t], axis=1) @ w.T)
    return att, sa, ea, na


if __name__ == "__main__":
    # Small shapes consistent with the module's forward.
    B, H = 2, 32
    Ls, Le, Ln = 8, 8, 8
    Ds, De, Dn = 16, 24, 8          # src_out_size, edit_vec_size, node_out_size

    key = jax.random.PRNGKey(0)
    ks = jax.random.split(key, 8)

    h_t = jax.random.normal(ks[0], (B, H), jnp.float32)
    src_enc = jax.random.normal(ks[1], (B, Ls, Ds), jnp.float32)
    src_lin = jax.random.normal(ks[2], (B, Ls, H), jnp.float32)
    edit_enc = jax.random.normal(ks[3], (B, Le, De), jnp.float32)
    edit_lin = jax.random.normal(ks[4], (B, Le, H), jnp.float32)
    node_enc = jax.random.normal(ks[5], (B, Ln, Dn), jnp.float32)
    node_lin = jax.random.normal(ks[6], (B, Ln, H), jnp.float32)

    # Deterministic pad masks (1.0 = padded); each batch row keeps valid slots.
    lens_s, lens_e, lens_n = jnp.array([6, 8]), jnp.array([8, 5]), jnp.array([7, 4])
    src_mask = (jnp.arange(Ls)[None, :] >= lens_s[:, None]).astype(jnp.float32)
    edit_mask = (jnp.arange(Le)[None, :] >= lens_e[:, None]).astype(jnp.float32)
    node_mask = (jnp.arange(Ln)[None, :] >= lens_n[:, None]).astype(jnp.float32)

    # att_vec_linear weight, torch layout (out=H, in=Ds+De+Dn+H), no bias.
    in_feat = Ds + De + Dn + H
    bound = 1.0 / jnp.sqrt(jnp.float32(in_feat))
    w = jax.random.uniform(ks[7], (H, in_feat), jnp.float32, -bound, bound)

    fused = jax.jit(both_attention)
    att_t, sa, ea, na = jax.block_until_ready(
        fused(
            h_t,
            src_enc, src_lin,
            edit_enc, edit_lin,
            node_enc, node_lin,
            src_mask, edit_mask, node_mask,
            w,
        )
    )

    ref_att, ref_sa, ref_ea, ref_na = _reference(
        h_t, src_enc, src_lin, edit_enc, edit_lin, node_enc, node_lin,
        src_mask, edit_mask, node_mask, w,
    )
    assert jnp.allclose(att_t, ref_att, atol=1e-5, rtol=1e-5)
    assert jnp.allclose(sa, ref_sa, atol=1e-5, rtol=1e-5)
    assert jnp.allclose(ea, ref_ea, atol=1e-5, rtol=1e-5)
    assert jnp.allclose(na, ref_na, atol=1e-5, rtol=1e-5)

    print("KERNEL_OK")
</pallas_src>

<mosaic_0001>
module attributes {stable_mosaic.version = 11 : i64} {
  func.func @_both_attention_kernel(%arg0: i32, %arg1: memref<2x32xf32, #tpu.memory_space<vmem>>, %arg2: memref<2x8x16xf32, #tpu.memory_space<vmem>>, %arg3: memref<2x8x32xf32, #tpu.memory_space<vmem>>, %arg4: memref<2x8xf32, #tpu.memory_space<vmem>>, %arg5: memref<2x8x24xf32, #tpu.memory_space<vmem>>, %arg6: memref<2x8x32xf32, #tpu.memory_space<vmem>>, %arg7: memref<2x8xf32, #tpu.memory_space<vmem>>, %arg8: memref<2x8x8xf32, #tpu.memory_space<vmem>>, %arg9: memref<2x8x32xf32, #tpu.memory_space<vmem>>, %arg10: memref<2x8xf32, #tpu.memory_space<vmem>>, %arg11: memref<16x32xf32, #tpu.memory_space<vmem>>, %arg12: memref<24x32xf32, #tpu.memory_space<vmem>>, %arg13: memref<8x32xf32, #tpu.memory_space<vmem>>, %arg14: memref<32x32xf32, #tpu.memory_space<vmem>>, %arg15: memref<2x128xf32, #tpu.memory_space<vmem>>) attributes {dimension_semantics = [#tpu.dimension_semantics<parallel>], iteration_bounds = array<i64: 1>, scalar_prefetch = 0 : i64, scratch_operands = 0 : i64, tpu.core_type = #tpu.core_type<tc>, window_params = [{transform_indices = @transform_0, window_bounds = array<i64: 2, 32>}, {transform_indices = @transform_1, window_bounds = array<i64: 2, 8, 16>}, {transform_indices = @transform_2, window_bounds = array<i64: 2, 8, 32>}, {transform_indices = @transform_3, window_bounds = array<i64: 2, 8>}, {transform_indices = @transform_4, window_bounds = array<i64: 2, 8, 24>}, {transform_indices = @transform_5, window_bounds = array<i64: 2, 8, 32>}, {transform_indices = @transform_6, window_bounds = array<i64: 2, 8>}, {transform_indices = @transform_7, window_bounds = array<i64: 2, 8, 8>}, {transform_indices = @transform_8, window_bounds = array<i64: 2, 8, 32>}, {transform_indices = @transform_9, window_bounds = array<i64: 2, 8>}, {pipeline_mode = #tpu.pipeline_mode<synchronous>, transform_indices = @transform_10, window_bounds = array<i64: 16, 32>}, {pipeline_mode = #tpu.pipeline_mode<synchronous>, transform_indices = @transform_11, window_bounds = array<i64: 24, 32>}, {pipeline_mode = #tpu.pipeline_mode<synchronous>, transform_indices = @transform_12, window_bounds = array<i64: 8, 32>}, {pipeline_mode = #tpu.pipeline_mode<synchronous>, transform_indices = @transform_13, window_bounds = array<i64: 32, 32>}, {transform_indices = @transform_14, window_bounds = array<i64: 2, 128>}]} {
    %c0 = arith.constant 0 : index
    %c0_0 = arith.constant 0 : index
    %0 = vector.load %arg1[%c0, %c0_0] : memref<2x32xf32, #tpu.memory_space<vmem>>, vector<2x32xf32>
    %c0_1 = arith.constant 0 : index
    %c0_2 = arith.constant 0 : index
    %c0_3 = arith.constant 0 : index
    %1 = vector.load %arg3[%c0_1, %c0_2, %c0_3] : memref<2x8x32xf32, #tpu.memory_space<vmem>>, vector<2x8x32xf32>
    %c0_4 = arith.constant 0 : index
    %c0_5 = arith.constant 0 : index
    %c0_6 = arith.constant 0 : index
    %2 = vector.load %arg2[%c0_4, %c0_5, %c0_6] : memref<2x8x16xf32, #tpu.memory_space<vmem>>, vector<2x8x16xf32>
    %3 = vector.shape_cast %0 : vector<2x32xf32> to vector<2x1x32xf32>
    %4 = vector.broadcast %3 : vector<2x1x32xf32> to vector<2x8x32xf32>
    %5 = arith.mulf %1, %4 : vector<2x8x32xf32>
    %cst = arith.constant dense<0.000000e+00> : vector<2x8xf32>
    %6 = vector.multi_reduction <add>, %5, %cst [2] : vector<2x8x32xf32> to vector<2x8xf32>
    %c0_7 = arith.constant 0 : index
    %c0_8 = arith.constant 0 : index
    %7 = vector.load %arg4[%c0_7, %c0_8] : memref<2x8xf32, #tpu.memory_space<vmem>>, vector<2x8xf32>
    %cst_9 = arith.constant 0.000000e+00 : f32
    %8 = vector.broadcast %cst_9 : f32 to vector<2x8xf32>
    %9 = arith.cmpf ogt, %7, %8 : vector<2x8xf32>
    %cst_10 = arith.constant 0xFF800000 : f32
    %10 = vector.broadcast %cst_10 : f32 to vector<2x8xf32>
    %11 = arith.select %9, %10, %6 : vector<2x8xi1>, vector<2x8xf32>
    %cst_11 = arith.constant dense<0xFF800000> : vector<2xf32>
    %12 = vector.multi_reduction <maximumf>, %11, %cst_11 [1] : vector<2x8xf32> to vector<2xf32>
    %13 = vector.shape_cast %12 : vector<2xf32> to vector<2x1xf32>
    %14 = vector.broadcast %13 : vector<2x1xf32> to vector<2x8xf32>
    %15 = arith.subf %11, %14 : vector<2x8xf32>
    %16 = math.exp %15 : vector<2x8xf32>
    %cst_12 = arith.constant dense<0.000000e+00> : vector<2xf32>
    %17 = vector.multi_reduction <add>, %16, %cst_12 [1] : vector<2x8xf32> to vector<2xf32>
    %18 = vector.shape_cast %17 : vector<2xf32> to vector<2x1xf32>
    %19 = tpu.reciprocal %18 {approx = true} : vector<2x1xf32> -> vector<2x1xf32>
    %20 = arith.mulf %18, %19 : vector<2x1xf32>
    %cst_13 = arith.constant 2.000000e+00 : f32
    %21 = vector.broadcast %cst_13 : f32 to vector<2x1xf32>
    %22 = arith.subf %21, %20 : vector<2x1xf32>
    %23 = arith.mulf %19, %22 : vector<2x1xf32>
    %24 = vector.broadcast %23 : vector<2x1xf32> to vector<2x8xf32>
    %25 = arith.mulf %16, %24 : vector<2x8xf32>
    %26 = vector.shape_cast %25 : vector<2x8xf32> to vector<2x8x1xf32>
    %27 = vector.broadcast %26 : vector<2x8x1xf32> to vector<2x8x16xf32>
    %28 = arith.mulf %27, %2 : vector<2x8x16xf32>
    %cst_14 = arith.constant dense<0.000000e+00> : vector<2x16xf32>
    %29 = vector.multi_reduction <add>, %28, %cst_14 [1] : vector<2x8x16xf32> to vector<2x16xf32>
    %c0_15 = arith.constant 0 : index
    %c0_16 = arith.constant 0 : index
    %c0_17 = arith.constant 0 : index
    %30 = vector.load %arg6[%c0_15, %c0_16, %c0_17] : memref<2x8x32xf32, #tpu.memory_space<vmem>>, vector<2x8x32xf32>
    %c0_18 = arith.constant 0 : index
    %c0_19 = arith.constant 0 : index
    %c0_20 = arith.constant 0 : index
    %31 = vector.load %arg5[%c0_18, %c0_19, %c0_20] : memref<2x8x24xf32, #tpu.memory_space<vmem>>, vector<2x8x24xf32>
    %32 = vector.shape_cast %0 : vector<2x32xf32> to vector<2x1x32xf32>
    %33 = vector.broadcast %32 : vector<2x1x32xf32> to vector<2x8x32xf32>
    %34 = arith.mulf %30, %33 : vector<2x8x32xf32>
    %cst_21 = arith.constant dense<0.000000e+00> : vector<2x8xf32>
    %35 = vector.multi_reduction <add>, %34, %cst_21 [2] : vector<2x8x32xf32> to vector<2x8xf32>
    %c0_22 = arith.constant 0 : index
    %c0_23 = arith.constant 0 : index
    %36 = vector.load %arg7[%c0_22, %c0_23] : memref<2x8xf32, #tpu.memory_space<vmem>>, vector<2x8xf32>
    %cst_24 = arith.constant 0.000000e+00 : f32
    %37 = vector.broadcast %cst_24 : f32 to vector<2x8xf32>
    %38 = arith.cmpf ogt, %36, %37 : vector<2x8xf32>
    %cst_25 = arith.constant 0xFF800000 : f32
    %39 = vector.broadcast %cst_25 : f32 to vector<2x8xf32>
    %40 = arith.select %38, %39, %35 : vector<2x8xi1>, vector<2x8xf32>
    %cst_26 = arith.constant dense<0xFF800000> : vector<2xf32>
    %41 = vector.multi_reduction <maximumf>, %40, %cst_26 [1] : vector<2x8xf32> to vector<2xf32>
    %42 = vector.shape_cast %41 : vector<2xf32> to vector<2x1xf32>
    %43 = vector.broadcast %42 : vector<2x1xf32> to vector<2x8xf32>
    %44 = arith.subf %40, %43 : vector<2x8xf32>
    %45 = math.exp %44 : vector<2x8xf32>
    %cst_27 = arith.constant dense<0.000000e+00> : vector<2xf32>
    %46 = vector.multi_reduction <add>, %45, %cst_27 [1] : vector<2x8xf32> to vector<2xf32>
    %47 = vector.shape_cast %46 : vector<2xf32> to vector<2x1xf32>
    %48 = tpu.reciprocal %47 {approx = true} : vector<2x1xf32> -> vector<2x1xf32>
    %49 = arith.mulf %47, %48 : vector<2x1xf32>
    %cst_28 = arith.constant 2.000000e+00 : f32
    %50 = vector.broadcast %cst_28 : f32 to vector<2x1xf32>
    %51 = arith.subf %50, %49 : vector<2x1xf32>
    %52 = arith.mulf %48, %51 : vector<2x1xf32>
    %53 = vector.broadcast %52 : vector<2x1xf32> to vector<2x8xf32>
    %54 = arith.mulf %45, %53 : vector<2x8xf32>
    %55 = vector.shape_cast %54 : vector<2x8xf32> to vector<2x8x1xf32>
    %56 = vector.broadcast %55 : vector<2x8x1xf32> to vector<2x8x24xf32>
    %57 = arith.mulf %56, %31 : vector<2x8x24xf32>
    %cst_29 = arith.constant dense<0.000000e+00> : vector<2x24xf32>
    %58 = vector.multi_reduction <add>, %57, %cst_29 [1] : vector<2x8x24xf32> to vector<2x24xf32>
    %c0_30 = arith.constant 0 : index
    %c0_31 = arith.constant 0 : index
    %c0_32 = arith.constant 0 : index
    %59 = vector.load %arg9[%c0_30, %c0_31, %c0_32] : memref<2x8x32xf32, #tpu.memory_space<vmem>>, vector<2x8x32xf32>
    %c0_33 = arith.constant 0 : index
    %c0_34 = arith.constant 0 : index
    %c0_35 = arith.constant 0 : index
    %60 = vector.load %arg8[%c0_33, %c0_34, %c0_35] : memref<2x8x8xf32, #tpu.memory_space<vmem>>, vector<2x8x8xf32>
    %61 = vector.shape_cast %0 : vector<2x32xf32> to vector<2x1x32xf32>
    %62 = vector.broadcast %61 : vector<2x1x32xf32> to vector<2x8x32xf32>
    %63 = arith.mulf %59, %62 : vector<2x8x32xf32>
    %cst_36 = arith.constant dense<0.000000e+00> : vector<2x8xf32>
    %64 = vector.multi_reduction <add>, %63, %cst_36 [2] : vector<2x8x32xf32> to vector<2x8xf32>
    %c0_37 = arith.constant 0 : index
    %c0_38 = arith.constant 0 : index
    %65 = vector.load %arg10[%c0_37, %c0_38] : memref<2x8xf32, #tpu.memory_space<vmem>>, vector<2x8xf32>
    %cst_39 = arith.constant 0.000000e+00 : f32
    %66 = vector.broadcast %cst_39 : f32 to vector<2x8xf32>
    %67 = arith.cmpf ogt, %65, %66 : vector<2x8xf32>
    %cst_40 = arith.constant 0xFF800000 : f32
    %68 = vector.broadcast %cst_40 : f32 to vector<2x8xf32>
    %69 = arith.select %67, %68, %64 : vector<2x8xi1>, vector<2x8xf32>
    %cst_41 = arith.constant dense<0xFF800000> : vector<2xf32>
    %70 = vector.multi_reduction <maximumf>, %69, %cst_41 [1] : vector<2x8xf32> to vector<2xf32>
    %71 = vector.shape_cast %70 : vector<2xf32> to vector<2x1xf32>
    %72 = vector.broadcast %71 : vector<2x1xf32> to vector<2x8xf32>
    %73 = arith.subf %69, %72 : vector<2x8xf32>
    %74 = math.exp %73 : vector<2x8xf32>
    %cst_42 = arith.constant dense<0.000000e+00> : vector<2xf32>
    %75 = vector.multi_reduction <add>, %74, %cst_42 [1] : vector<2x8xf32> to vector<2xf32>
    %76 = vector.shape_cast %75 : vector<2xf32> to vector<2x1xf32>
    %77 = tpu.reciprocal %76 {approx = true} : vector<2x1xf32> -> vector<2x1xf32>
    %78 = arith.mulf %76, %77 : vector<2x1xf32>
    %cst_43 = arith.constant 2.000000e+00 : f32
    %79 = vector.broadcast %cst_43 : f32 to vector<2x1xf32>
    %80 = arith.subf %79, %78 : vector<2x1xf32>
    %81 = arith.mulf %77, %80 : vector<2x1xf32>
    %82 = vector.broadcast %81 : vector<2x1xf32> to vector<2x8xf32>
    %83 = arith.mulf %74, %82 : vector<2x8xf32>
    %84 = vector.shape_cast %83 : vector<2x8xf32> to vector<2x8x1xf32>
    %85 = vector.broadcast %84 : vector<2x8x1xf32> to vector<2x8x8xf32>
    %86 = arith.mulf %85, %60 : vector<2x8x8xf32>
    %cst_44 = arith.constant dense<0.000000e+00> : vector<2x8xf32>
    %87 = vector.multi_reduction <add>, %86, %cst_44 [1] : vector<2x8x8xf32> to vector<2x8xf32>
    %c0_45 = arith.constant 0 : index
    %c0_46 = arith.constant 0 : index
    %88 = vector.load %arg11[%c0_45, %c0_46] : memref<16x32xf32, #tpu.memory_space<vmem>>, vector<16x32xf32>
    %cst_47 = arith.constant dense<0.000000e+00> : vector<2x32xf32>
    %89 = tpu.matmul %29, %88, %cst_47 {dimension_numbers = #tpu.dot_dimension_numbers<[1], [0], [0], [1], [0, 0, 1, 1], [], []>} : vector<2x16xf32>, vector<16x32xf32>, vector<2x32xf32> -> vector<2x32xf32>
    %c0_48 = arith.constant 0 : index
    %c0_49 = arith.constant 0 : index
    %90 = vector.load %arg12[%c0_48, %c0_49] : memref<24x32xf32, #tpu.memory_space<vmem>>, vector<24x32xf32>
    %cst_50 = arith.constant dense<0.000000e+00> : vector<2x32xf32>
    %91 = tpu.matmul %58, %90, %cst_50 {dimension_numbers = #tpu.dot_dimension_numbers<[1], [0], [0], [1], [0, 0, 1, 1], [], []>} : vector<2x24xf32>, vector<24x32xf32>, vector<2x32xf32> -> vector<2x32xf32>
    %92 = arith.addf %89, %91 : vector<2x32xf32>
    %c0_51 = arith.constant 0 : index
    %c0_52 = arith.constant 0 : index
    %93 = vector.load %arg13[%c0_51, %c0_52] : memref<8x32xf32, #tpu.memory_space<vmem>>, vector<8x32xf32>
    %cst_53 = arith.constant dense<0.000000e+00> : vector<2x32xf32>
    %94 = tpu.matmul %87, %93, %cst_53 {dimension_numbers = #tpu.dot_dimension_numbers<[1], [0], [0], [1], [0, 0, 1, 1], [], []>} : vector<2x8xf32>, vector<8x32xf32>, vector<2x32xf32> -> vector<2x32xf32>
    %95 = arith.addf %92, %94 : vector<2x32xf32>
    %c0_54 = arith.constant 0 : index
    %c0_55 = arith.constant 0 : index
    %96 = vector.load %arg14[%c0_54, %c0_55] : memref<32x32xf32, #tpu.memory_space<vmem>>, vector<32x32xf32>
    %cst_56 = arith.constant dense<0.000000e+00> : vector<2x32xf32>
    %97 = tpu.matmul %0, %96, %cst_56 {dimension_numbers = #tpu.dot_dimension_numbers<[1], [0], [0], [1], [0, 0, 1, 1], [], []>} : vector<2x32xf32>, vector<32x32xf32>, vector<2x32xf32> -> vector<2x32xf32>
    %98 = arith.addf %95, %97 : vector<2x32xf32>
    %99 = math.tanh %98 : vector<2x32xf32>
    %c0_57 = arith.constant 0 : index
    %c0_58 = arith.constant 0 : index
    %100 = vector.load %arg15[%c0_57, %c0_58] : memref<2x128xf32, #tpu.memory_space<vmem>>, vector<2x32xf32>
    tpu.vector_store %arg15[%c0_57, %c0_58], %99 {strides = array<i32>} : memref<2x128xf32, #tpu.memory_space<vmem>>, vector<2x32xf32>,
    %c0_59 = arith.constant 0 : index
    %c32 = arith.constant 32 : index
    %101 = vector.load %arg15[%c0_59, %c32] : memref<2x128xf32, #tpu.memory_space<vmem>>, vector<2x8xf32>
    tpu.vector_store %arg15[%c0_59, %c32], %25 {strides = array<i32>} : memref<2x128xf32, #tpu.memory_space<vmem>>, vector<2x8xf32>,
    %c0_60 = arith.constant 0 : index
    %c40 = arith.constant 40 : index
    %102 = vector.load %arg15[%c0_60, %c40] : memref<2x128xf32, #tpu.memory_space<vmem>>, vector<2x8xf32>
    tpu.vector_store %arg15[%c0_60, %c40], %54 {strides = array<i32>} : memref<2x128xf32, #tpu.memory_space<vmem>>, vector<2x8xf32>,
    %c0_61 = arith.constant 0 : index
    %c48 = arith.constant 48 : index
    %103 = vector.load %arg15[%c0_61, %c48] : memref<2x128xf32, #tpu.memory_space<vmem>>, vector<2x8xf32>
    tpu.vector_store %arg15[%c0_61, %c48], %83 {strides = array<i32>} : memref<2x128xf32, #tpu.memory_space<vmem>>, vector<2x8xf32>,
    %cst_62 = arith.constant 0.000000e+00 : f32
    %104 = vector.broadcast %cst_62 : f32 to vector<2x72xf32>
    %c0_63 = arith.constant 0 : index
    %c56 = arith.constant 56 : index
    %105 = vector.load %arg15[%c0_63, %c56] : memref<2x128xf32, #tpu.memory_space<vmem>>, vector<2x72xf32>
    tpu.vector_store %arg15[%c0_63, %c56], %104 {strides = array<i32>} : memref<2x128xf32, #tpu.memory_space<vmem>>, vector<2x72xf32>,
    return
  }
  func.func @transform_0(%arg0: i32) -> (i32, i32) {
    %c0_i32 = arith.constant 0 : i32
    %c0_i32_0 = arith.constant 0 : i32
    return %arg0, %c0_i32 : i32, i32
  }
  func.func @transform_1(%arg0: i32) -> (i32, i32, i32) {
    %c0_i32 = arith.constant 0 : i32
    %c0_i32_0 = arith.constant 0 : i32
    %c0_i32_1 = arith.constant 0 : i32
    return %arg0, %c0_i32, %c0_i32_0 : i32, i32, i32
  }
  func.func @transform_2(%arg0: i32) -> (i32, i32, i32) {
    %c0_i32 = arith.constant 0 : i32
    %c0_i32_0 = arith.constant 0 : i32
    %c0_i32_1 = arith.constant 0 : i32
    return %arg0, %c0_i32, %c0_i32_0 : i32, i32, i32
  }
  func.func @transform_3(%arg0: i32) -> (i32, i32) {
    %c0_i32 = arith.constant 0 : i32
    %c0_i32_0 = arith.constant 0 : i32
    return %arg0, %c0_i32 : i32, i32
  }
  func.func @transform_4(%arg0: i32) -> (i32, i32, i32) {
    %c0_i32 = arith.constant 0 : i32
    %c0_i32_0 = arith.constant 0 : i32
    %c0_i32_1 = arith.constant 0 : i32
    return %arg0, %c0_i32, %c0_i32_0 : i32, i32, i32
  }
  func.func @transform_5(%arg0: i32) -> (i32, i32, i32) {
    %c0_i32 = arith.constant 0 : i32
    %c0_i32_0 = arith.constant 0 : i32
    %c0_i32_1 = arith.constant 0 : i32
    return %arg0, %c0_i32, %c0_i32_0 : i32, i32, i32
  }
  func.func @transform_6(%arg0: i32) -> (i32, i32) {
    %c0_i32 = arith.constant 0 : i32
    %c0_i32_0 = arith.constant 0 : i32
    return %arg0, %c0_i32 : i32, i32
  }
  func.func @transform_7(%arg0: i32) -> (i32, i32, i32) {
    %c0_i32 = arith.constant 0 : i32
    %c0_i32_0 = arith.constant 0 : i32
    %c0_i32_1 = arith.constant 0 : i32
    return %arg0, %c0_i32, %c0_i32_0 : i32, i32, i32
  }
  func.func @transform_8(%arg0: i32) -> (i32, i32, i32) {
    %c0_i32 = arith.constant 0 : i32
    %c0_i32_0 = arith.constant 0 : i32
    %c0_i32_1 = arith.constant 0 : i32
    return %arg0, %c0_i32, %c0_i32_0 : i32, i32, i32
  }
  func.func @transform_9(%arg0: i32) -> (i32, i32) {
    %c0_i32 = arith.constant 0 : i32
    %c0_i32_0 = arith.constant 0 : i32
    return %arg0, %c0_i32 : i32, i32
  }
  func.func @transform_10(%arg0: i32) -> (i32, i32) {
    %c0_i32 = arith.constant 0 : i32
    %c0_i32_0 = arith.constant 0 : i32
    %c0_i32_1 = arith.constant 0 : i32
    return %c0_i32, %c0_i32_0 : i32, i32
  }
  func.func @transform_11(%arg0: i32) -> (i32, i32) {
    %c0_i32 = arith.constant 0 : i32
    %c0_i32_0 = arith.constant 0 : i32
    %c0_i32_1 = arith.constant 0 : i32
    return %c0_i32, %c0_i32_0 : i32, i32
  }
  func.func @transform_12(%arg0: i32) -> (i32, i32) {
    %c0_i32 = arith.constant 0 : i32
    %c0_i32_0 = arith.constant 0 : i32
    %c0_i32_1 = arith.constant 0 : i32
    return %c0_i32, %c0_i32_0 : i32, i32
  }
  func.func @transform_13(%arg0: i32) -> (i32, i32) {
    %c0_i32 = arith.constant 0 : i32
    %c0_i32_0 = arith.constant 0 : i32
    %c0_i32_1 = arith.constant 0 : i32
    return %c0_i32, %c0_i32_0 : i32, i32
  }
  func.func @transform_14(%arg0: i32) -> (i32, i32) {
    %c0_i32 = arith.constant 0 : i32
    %c0_i32_0 = arith.constant 0 : i32
    return %arg0, %c0_i32 : i32, i32
  }
}

</mosaic_0001>

<llo_original>
// kernel: both_attention.1
$region0: #{both_attention.1}
  #allocation0 [shape = 'u32[]', space=smem, size = 0x4, offset = 0x4, fixed_abs, tag = 'smem constant byte address 0x4 - core index']
  #allocation1 [shape = 'u32[144,128]{1,0:T(1,128)}', space=vmem, size = 0x12000, scoped, tag = 'internal scratch']
  %s0 = inlined_call_operand.vmem [shape: f32[2,32], index: 0, kind: input, shape index: {}]
  %s1 = inlined_call_operand.vmem [shape: f32[2,8,16], index: 1, kind: input, shape index: {}]
  %s2 = inlined_call_operand.vmem [shape: f32[2,8,32], index: 2, kind: input, shape index: {}]
  %s3 = inlined_call_operand.vmem [shape: f32[2,8], index: 3, kind: input, shape index: {}]
  %s4 = inlined_call_operand.vmem [shape: f32[2,8,24], index: 4, kind: input, shape index: {}]
  %s5 = inlined_call_operand.vmem [shape: f32[2,8,32], index: 5, kind: input, shape index: {}]
  %s6 = inlined_call_operand.vmem [shape: f32[2,8], index: 6, kind: input, shape index: {}]
  %s7 = inlined_call_operand.vmem [shape: f32[2,8,8], index: 7, kind: input, shape index: {}]
  %s8 = inlined_call_operand.vmem [shape: f32[2,8,32], index: 8, kind: input, shape index: {}]
  %s9 = inlined_call_operand.vmem [shape: f32[2,8], index: 9, kind: input, shape index: {}]
  %s10 = inlined_call_operand.vmem [shape: f32[16,32], index: 10, kind: input, shape index: {}]
  %s11 = inlined_call_operand.vmem [shape: f32[24,32], index: 11, kind: input, shape index: {}]
  %s12 = inlined_call_operand.vmem [shape: f32[8,32], index: 12, kind: input, shape index: {}]
  %s13 = inlined_call_operand.vmem [shape: f32[32,32], index: 13, kind: input, shape index: {}]
  %s14 = inlined_call_operand.vmem [shape: f32[2,128], index: 14, kind: output, shape index: {}]
  %s15 = sld [smem:[#allocation0]]
  $region66: #{both_attention.1} parent=0
    _
  %s17 = ssub.s32 1, %s15
  %s18 = scalar_select 0, %s17, %s15
  // Predicated region
  $region2: #{both_attention.1} parent=0 // pred_check
    _
  $region3: #{both_attention.1} parent=0 // pred_check_branch
    %20 = sbr.rel (0) target = $region5
  $region4: #{both_attention.1} parent=0 // pred_region
    _
  $region5: #{both_attention.1} parent=0 // pred_fallthru
    _
  // Predicated region
  $region6: #{both_attention.1} parent=0 // pred_check
    _
  $region7: #{both_attention.1} parent=0 // pred_check_branch
    %22 = sbr.rel (0) target = $region9
  $region8: #{both_attention.1} parent=0 // pred_region
    _
  $region9: #{both_attention.1} parent=0 // pred_fallthru
    _
  // Predicated region
  $region10: #{both_attention.1} parent=0 // pred_check
    _
  $region11: #{both_attention.1} parent=0 // pred_check_branch
    %24 = sbr.rel (0) target = $region13
  $region12: #{both_attention.1} parent=0 // pred_region
    _
  $region13: #{both_attention.1} parent=0 // pred_fallthru
    _
  // Predicated region
  $region14: #{both_attention.1} parent=0 // pred_check
    _
  $region15: #{both_attention.1} parent=0 // pred_check_branch
    %26 = sbr.rel (0) target = $region17
  $region16: #{both_attention.1} parent=0 // pred_region
    _
  $region17: #{both_attention.1} parent=0 // pred_fallthru
    _
  // Predicated region
  $region18: #{both_attention.1} parent=0 // pred_check
    _
  $region19: #{both_attention.1} parent=0 // pred_check_branch
    %28 = sbr.rel (0) target = $region21
  $region20: #{both_attention.1} parent=0 // pred_region
    _
  $region21: #{both_attention.1} parent=0 // pred_fallthru
    _
  // Predicated region
  $region22: #{both_attention.1} parent=0 // pred_check
    _
  $region23: #{both_attention.1} parent=0 // pred_check_branch
    %30 = sbr.rel (0) target = $region25
  $region24: #{both_attention.1} parent=0 // pred_region
    _
  $region25: #{both_attention.1} parent=0 // pred_fallthru
    _
  // Predicated region
  $region26: #{both_attention.1} parent=0 // pred_check
    _
  $region27: #{both_attention.1} parent=0 // pred_check_branch
    %32 = sbr.rel (0) target = $region29
  $region28: #{both_attention.1} parent=0 // pred_region
    _
  $region29: #{both_attention.1} parent=0 // pred_fallthru
    _
  // Predicated region
  $region30: #{both_attention.1} parent=0 // pred_check
    _
  $region31: #{both_attention.1} parent=0 // pred_check_branch
    %34 = sbr.rel (0) target = $region33
  $region32: #{both_attention.1} parent=0 // pred_region
    _
  $region33: #{both_attention.1} parent=0 // pred_fallthru
    _
  // Predicated region
  $region34: #{both_attention.1} parent=0 // pred_check
    _
  $region35: #{both_attention.1} parent=0 // pred_check_branch
    %36 = sbr.rel (0) target = $region37
  $region36: #{both_attention.1} parent=0 // pred_region
    _
  $region37: #{both_attention.1} parent=0 // pred_fallthru
    _
  // Predicated region
  $region38: #{both_attention.1} parent=0 // pred_check
    _
  $region39: #{both_attention.1} parent=0 // pred_check_branch
    %38 = sbr.rel (0) target = $region41
  $region40: #{both_attention.1} parent=0 // pred_region
    _
  $region41: #{both_attention.1} parent=0 // pred_fallthru
    _
  // Predicated region
  $region42: #{both_attention.1} parent=0 // pred_check
    _
  $region43: #{both_attention.1} parent=0 // pred_check_branch
    %40 = sbr.rel (0) target = $region45
  $region44: #{both_attention.1} parent=0 // pred_region
    _
  $region45: #{both_attention.1} parent=0 // pred_fallthru
    _
  // Predicated region
  $region46: #{both_attention.1} parent=0 // pred_check
    _
  $region47: #{both_attention.1} parent=0 // pred_check_branch
    %42 = sbr.rel (0) target = $region49
  $region48: #{both_attention.1} parent=0 // pred_region
    _
  $region49: #{both_attention.1} parent=0 // pred_fallthru
    _
  // Predicated region
  $region50: #{both_attention.1} parent=0 // pred_check
    _
  $region51: #{both_attention.1} parent=0 // pred_check_branch
    %44 = sbr.rel (0) target = $region53
  $region52: #{both_attention.1} parent=0 // pred_region
    _
  $region53: #{both_attention.1} parent=0 // pred_fallthru
    _
  // Predicated region
  $region54: #{both_attention.1} parent=0 // pred_check
    _
  $region55: #{both_attention.1} parent=0 // pred_check_branch
    %46 = sbr.rel (0) target = $region57
  $region56: #{both_attention.1} parent=0 // pred_region
    _
  $region57: #{both_attention.1} parent=0 // pred_fallthru
    _
  %v47 = vld [vmem:[%s0] sm:$0x3]
  %v48 = vld [vmem:[%s2] sm:$0xff]
  %v49 = vld [vmem:[%s2 + $0x8] sm:$0xff]
  %v50 = vld [vmem:[%s1] sm:$0xff]
  %v51 = vld [vmem:[%s1 + $0x8] sm:$0xff]
  %v54 = vunpack.c.l.s4 1966171168
  %v55 = vunpack.c.0.s8 %v54
  %v56 = vlaneseq
  %v57 = vshrl.u32 %v56, 7
  %v58 = vsub.s32 %v55, %v57
  %v59 = vrot.slane %v47, %v58
  %v60 = vcombine.high %v59, %v59
  %v62 = vunpack.c.l.s4 1966171168
  %v63 = vunpack.c.0.s8 %v62
  %v64 = vlaneseq
  %v65 = vshrl.u32 %v64, 7
  %v66 = vsub.s32 %v63, %v65
  %v67 = vrot.slane %v59, %v66
  %v69 = vunpack.c.l.s4 1966171168
  %v70 = vunpack.c.0.s8 %v69
  %v71 = vlaneseq
  %v72 = vshrl.u32 %v71, 7
  %v73 = vsub.s32 %v70, %v72
  %v74 = vrot.slane %v60, %v73
  %v75 = vlaneseq
  %v76 = vshrl.u32 %v75, 7
  %v77 = vsub.s32 0, %v76
  %v78 = vrot.slane %v67, %v77
  %v79 = vlaneseq
  %v80 = vshrl.u32 %v79, 7
  %v81 = vsub.s32 0, %v80
  %v82 = vrot.slane %v74, %v81
  %v85 = vmul.f32 %v48, %v78
  %v86 = vmul.f32 %v49, %v82
  %vm87 = vcmask 261120
  %v88 = vsel %vm87, %v85, 0.0
  %89 = vadd.xlane.f32.xlu0 %v88
  %v90 = vpop.xlane.xlu0 %89
  %v91 = vsel %vm87, %v86, 0.0
  %92 = vadd.xlane.f32.xlu0 %v91
  %v93 = vpop.xlane.xlu0 %92
  %v94 = vld [vmem:[%s3] sm:$0x3]
  %vm95 = vcmp.gt.f32.partialorder %v94, 0.0
  %v98 = vlaneseq
  %v99 = vand.u32 %v98, 127
  %v100 = vlaneseq
  %v101 = vshrl.u32 %v100, 7
  %v102 = vsub.s32 %v99, %v101
  %v103 = vrot.slane %v90, %v102
  %v104 = vlaneseq
  %v105 = vshrl.u32 %v104, 7
  %v106 = vsub.s32 %v99, %v105
  %v107 = vrot.slane %v93, %v106
  %vm108 = vcmask 1041409
  %v109 = vsel %vm108, %v107, %v103
  %v111 = vsel %vm95, -inf, %v109
  %vm112 = vcmask 58368
  %v113 = vsel %vm112, %v111, -inf
  %114 = vmax.xlane.f32.xlu0 %v113
  %v115 = vpop.xlane.xlu0 %114
  %v116 = vsub.f32 %v111, %v115
  %v117 = vmul.f32 %v116, 1.442695
  %v118 = vpow.pop %v117
  %v119 = vsel %vm112, %v118, 0.0
  %120 = vadd.xlane.f32.xlu0 %v119
  %v121 = vpop.xlane.xlu0 %120
  %v122 = vrcp.pop %v121
  %v123 = vmul.f32 %v121, %v122
  %v124 = vsub.f32 2.0, %v123
  %v125 = vmul.f32 %v122, %v124
  %v126 = vmul.f32 %v118, %v125
  %v127 = vlaneseq
  %v128 = vshrl.u32 %v127, 7
  %v129 = vsub.s32 0, %v128
  %v130 = vrot.slane %v126, %v129
  %132 = vbcast.lane.b32.xlu0 %v130, 256
  %v133 = vpop.permute.xlu0 %132
  %v134 = vlaneseq
  %v135 = vshrl.u32 %v134, 7
  %v136 = vsub.s32 1, %v135
  %v137 = vrot.slane %v126, %v136
  %139 = vbcast.lane.b32.xlu0 %v137, 256
  %v140 = vpop.permute.xlu0 %139
  %v141 = vmul.f32 %v133, %v50
  %v142 = vmul.f32 %v140, %v51
  %vm143 = vcmask 130048
  %v144 = vsel %vm143, %v141, 0.0
  %v145 = vrot.slane %v144, 4
  %v146 = vadd.f32 %v144, %v145
  %v147 = vrot.slane %v146, 2
  %v148 = vadd.f32 %v146, %v147
  %v149 = vrot.slane %v148, 1
  %v150 = vadd.f32 %v148, %v149
  %v151 = vsel %vm143, %v142, 0.0
  %v152 = vrot.slane %v151, 4
  %v153 = vadd.f32 %v151, %v152
  %v154 = vrot.slane %v153, 2
  %v155 = vadd.f32 %v153, %v154
  %v156 = vrot.slane %v155, 1
  %v157 = vadd.f32 %v155, %v156
  %v158 = vld [vmem:[%s5] sm:$0xff]
  %v159 = vld [vmem:[%s5 + $0x8] sm:$0xff]
  %v160 = vld [vmem:[%s4] sm:$0xff]
  %v161 = vld [vmem:[%s4 + $0x8] sm:$0xff]
  %v162 = vmul.f32 %v158, %v78
  %v163 = vmul.f32 %v159, %v82
  %v164 = vsel %vm87, %v162, 0.0
  %165 = vadd.xlane.f32.xlu0 %v164
  %v166 = vpop.xlane.xlu0 %165
  %v167 = vsel %vm87, %v163, 0.0
  %168 = vadd.xlane.f32.xlu0 %v167
  %v169 = vpop.xlane.xlu0 %168
  %v170 = vld [vmem:[%s6] sm:$0x3]
  %vm171 = vcmp.gt.f32.partialorder %v170, 0.0
  %v174 = vlaneseq
  %v175 = vshrl.u32 %v174, 7
  %v176 = vsub.s32 %v99, %v175
  %v177 = vrot.slane %v166, %v176
  %v178 = vlaneseq
  %v179 = vshrl.u32 %v178, 7
  %v180 = vsub.s32 %v99, %v179
  %v181 = vrot.slane %v169, %v180
  %v182 = vsel %vm108, %v181, %v177
  %v184 = vsel %vm171, -inf, %v182
  %v185 = vsel %vm112, %v184, -inf
  %186 = vmax.xlane.f32.xlu0 %v185
  %v187 = vpop.xlane.xlu0 %186
  %v188 = vsub.f32 %v184, %v187
  %v189 = vmul.f32 %v188, 1.442695
  %v190 = vpow.pop %v189
  %v191 = vsel %vm112, %v190, 0.0
  %192 = vadd.xlane.f32.xlu0 %v191
  %v193 = vpop.xlane.xlu0 %192
  %v194 = vrcp.pop %v193
  %v195 = vmul.f32 %v193, %v194
  %v196 = vsub.f32 2.0, %v195
  %v197 = vmul.f32 %v194, %v196
  %v198 = vmul.f32 %v190, %v197
  %v199 = vlaneseq
  %v200 = vshrl.u32 %v199, 7
  %v201 = vsub.s32 0, %v200
  %v202 = vrot.slane %v198, %v201
  %204 = vbcast.lane.b32.xlu0 %v202, 256
  %v205 = vpop.permute.xlu0 %204
  %v206 = vlaneseq
  %v207 = vshrl.u32 %v206, 7
  %v208 = vsub.s32 1, %v207
  %v209 = vrot.slane %v198, %v208
  %211 = vbcast.lane.b32.xlu0 %v209, 256
  %v212 = vpop.permute.xlu0 %211
  %v213 = vmul.f32 %v205, %v160
  %v214 = vmul.f32 %v212, %v161
  %vm215 = vcmask 195584
  %v216 = vsel %vm215, %v213, 0.0
  %v217 = vrot.slane %v216, 4
  %v218 = vadd.f32 %v216, %v217
  %v219 = vrot.slane %v218, 2
  %v220 = vadd.f32 %v218, %v219
  %v221 = vrot.slane %v220, 1
  %v222 = vadd.f32 %v220, %v221
  %v223 = vsel %vm215, %v214, 0.0
  %v224 = vrot.slane %v223, 4
  %v225 = vadd.f32 %v223, %v224
  %v226 = vrot.slane %v225, 2
  %v227 = vadd.f32 %v225, %v226
  %v228 = vrot.slane %v227, 1
  %v229 = vadd.f32 %v227, %v228
  %v230 = vld [vmem:[%s8] sm:$0xff]
  %v231 = vld [vmem:[%s8 + $0x8] sm:$0xff]
  %v232 = vld [vmem:[%s7] sm:$0xff]
  %v233 = vld [vmem:[%s7 + $0x8] sm:$0xff]
  %v234 = vmul.f32 %v230, %v78
  %v235 = vmul.f32 %v231, %v82
  %v236 = vsel %vm87, %v234, 0.0
  %237 = vadd.xlane.f32.xlu0 %v236
  %v238 = vpop.xlane.xlu0 %237
  %v239 = vsel %vm87, %v235, 0.0
  %240 = vadd.xlane.f32.xlu0 %v239
  %v241 = vpop.xlane.xlu0 %240
  %v242 = vld [vmem:[%s9] sm:$0x3]
  %vm243 = vcmp.gt.f32.partialorder %v242, 0.0
  %v246 = vlaneseq
  %v247 = vshrl.u32 %v246, 7
  %v248 = vsub.s32 %v99, %v247
  %v249 = vrot.slane %v238, %v248
  %v250 = vlaneseq
  %v251 = vshrl.u32 %v250, 7
  %v252 = vsub.s32 %v99, %v251
  %v253 = vrot.slane %v241, %v252
  %v254 = vsel %vm108, %v253, %v249
  %v256 = vsel %vm243, -inf, %v254
  %v257 = vsel %vm112, %v256, -inf
  %258 = vmax.xlane.f32.xlu0 %v257
  %v259 = vpop.xlane.xlu0 %258
  %v260 = vsub.f32 %v256, %v259
  %v261 = vmul.f32 %v260, 1.442695
  %v262 = vpow.pop %v261
  %v263 = vsel %vm112, %v262, 0.0
  %264 = vadd.xlane.f32.xlu0 %v263
  %v265 = vpop.xlane.xlu0 %264
  %v266 = vrcp.pop %v265
  %v267 = vmul.f32 %v265, %v266
  %v268 = vsub.f32 2.0, %v267
  %v269 = vmul.f32 %v266, %v268
  %v270 = vmul.f32 %v262, %v269
  %v271 = vlaneseq
  %v272 = vshrl.u32 %v271, 7
  %v273 = vsub.s32 0, %v272
  %v274 = vrot.slane %v270, %v273
  %276 = vbcast.lane.b32.xlu0 %v274, 256
  %v277 = vpop.permute.xlu0 %276
  %v278 = vlaneseq
  %v279 = vshrl.u32 %v278, 7
  %v280 = vsub.s32 1, %v279
  %v281 = vrot.slane %v270, %v280
  %283 = vbcast.lane.b32.xlu0 %v281, 256
  %v284 = vpop.permute.xlu0 %283
  %v285 = vmul.f32 %v277, %v232
  %v286 = vmul.f32 %v284, %v233
  %vm287 = vcmask 64512
  %v288 = vsel %vm287, %v285, 0.0
  %v289 = vrot.slane %v288, 4
  %v290 = vadd.f32 %v288, %v289
  %v291 = vrot.slane %v290, 2
  %v292 = vadd.f32 %v290, %v291
  %v293 = vrot.slane %v292, 1
  %v294 = vadd.f32 %v292, %v293
  %v295 = vsel %vm287, %v286, 0.0
  %v296 = vrot.slane %v295, 4
  %v297 = vadd.f32 %v295, %v296
  %v298 = vrot.slane %v297, 2
  %v299 = vadd.f32 %v297, %v298
  %v300 = vrot.slane %v299, 1
  %v301 = vadd.f32 %v299, %v300
  %v302 = vld [vmem:[%s10] sm:$0xff]
  %v303 = vld [vmem:[%s10 + $0x8] sm:$0xff]
  %v304 = vld [vmem:[%s11] sm:$0xff]
  %v305 = vld [vmem:[%s11 + $0x8] sm:$0xff]
  %v306 = vld [vmem:[%s11 + $0x10] sm:$0xff]
  %v309 = vsel %vm108, %v229, %v222
  %v310 = vsel %vm215, %v309, 0
  %312 = vmatprep.subr.mxu0 0.0
  %313 = vmatpush1.msra.mxu0 %v304
  %314 = vmatprep.subr.mxu0 0.0
  %315 = vmatpush1.msra.mxu0 %v305
  %316 = vmatprep.subr.mxu0 0.0
  %317 = vmatpush1.msra.mxu0 %v306
  %318 = vmatprep.subr.mxu0 0.0
  %319 = vmatpush1.msra.mxu0 0.0
  %320 = vmatprep.subr.mxu0 0.0
  %321 = vmatpush1.msra.mxu0 0.0
  %322 = vmatprep.subr.mxu0 0.0
  %323 = vmatpush1.msra.mxu0 0.0
  %324 = vmatprep.subr.mxu0 0.0
  %325 = vmatpush1.msra.mxu0 0.0
  %326 = vmatprep.subr.mxu0 0.0
  %327 = vmatpush1.msra.mxu0 0.0
  %328 = vmatprep.subr.mxu0 0.0
  %329 = vmatpush1.msra.mxu0 0.0
  %330 = vmatprep.subr.mxu0 0.0
  %331 = vmatpush1.msra.mxu0 0.0
  %332 = vmatprep.subr.mxu0 0.0
  %333 = vmatpush1.msra.mxu0 0.0
  %334 = vmatprep.subr.mxu0 0.0
  %335 = vmatpush1.msra.mxu0 0.0
  %336 = vmatprep.subr.mxu0 0.0
  %337 = vmatpush1.msra.mxu0 0.0
  %338 = vmatprep.subr.mxu0 0.0
  %339 = vmatpush1.msra.mxu0 0.0
  %340 = vmatprep.subr.mxu0 0.0
  %341 = vmatpush1.msra.mxu0 0.0
  %342 = vmatprep.subr.mxu0 0.0
  %343 = vmatpush1.msra.mxu0 0.0
  %344 = vmatprep.subr.mxu0 0.0
  %345 = vmatpush1.msra.mxu0 0.0
  %346 = vmatprep.subr.mxu0 0.0
  %347 = vmatpush1.msra.mxu0 0.0
  %348 = vmatprep.subr.mxu0 0.0
  %349 = vmatpush1.msra.mxu0 0.0
  %350 = vmatprep.subr.mxu0 0.0
  %351 = vmatpush1.msra.mxu0 0.0
  %352 = vmatprep.subr.mxu0 0.0
  %353 = vmatpush1.msra.mxu0 0.0
  %354 = vmatprep.subr.mxu0 0.0
  %355 = vmatpush1.msra.mxu0 0.0
  %356 = vmatprep.subr.mxu0 0.0
  %357 = vmatpush1.msra.mxu0 0.0
  %358 = vmatprep.subr.mxu0 0.0
  %359 = vmatpush1.msra.mxu0 0.0
  %360 = vmatprep.subr.mxu0 0.0
  %361 = vmatpush1.msra.mxu0 0.0
  %362 = vmatprep.subr.mxu0 0.0
  %363 = vmatpush1.msra.mxu0 0.0
  %364 = vmatprep.subr.mxu0 0.0
  %365 = vmatpush1.msra.mxu0 0.0
  %366 = vmatprep.subr.mxu0 0.0
  %367 = vmatpush1.msra.mxu0 0.0
  %368 = vmatprep.subr.mxu0 0.0
  %369 = vmatpush1.msra.mxu0 0.0
  %370 = vmatprep.subr.mxu0 0.0
  %371 = vmatpush1.msra.mxu0 0.0
  %372 = vmatprep.subr.mxu0 0.0
  %373 = vmatpush1.msra.mxu0 0.0
  %374 = vmatprep.subr.mxu0 0.0
  %375 = vmatpush1.msra.mxu0 0.0
  %376 = vmatprep.mubr.f32.mxu0 0.0
  %377 = vmatmul.mubr.f32.gmra.mrb[0].mxu0 %v310
  %v378 = vpop.f32.mrb[0].mxu0
  %v379 = vadd.f32 0.0, %v378
  %v380 = vpop.f32.mrb[0].mxu0
  %381 = vdwg.mxu0
  %v384 = vsel %vm108, %v157, %v150
  %v385 = vsel %vm143, %v384, 0
  %387 = vmatprep.subr.mxu0 0.0
  %388 = vmatpush1.msra.mxu0 %v302
  %389 = vmatprep.subr.mxu0 0.0
  %390 = vmatpush1.msra.mxu0 %v303
  %391 = vmatprep.subr.mxu0 0.0
  %392 = vmatpush1.msra.mxu0 0.0
  %393 = vmatprep.subr.mxu0 0.0
  %394 = vmatpush1.msra.mxu0 0.0
  %395 = vmatprep.subr.mxu0 0.0
  %396 = vmatpush1.msra.mxu0 0.0
  %397 = vmatprep.subr.mxu0 0.0
  %398 = vmatpush1.msra.mxu0 0.0
  %399 = vmatprep.subr.mxu0 0.0
  %400 = vmatpush1.msra.mxu0 0.0
  %401 = vmatprep.subr.mxu0 0.0
  %402 = vmatpush1.msra.mxu0 0.0
  %403 = vmatprep.subr.mxu0 0.0
  %404 = vmatpush1.msra.mxu0 0.0
  %405 = vmatprep.subr.mxu0 0.0
  %406 = vmatpush1.msra.mxu0 0.0
  %407 = vmatprep.subr.mxu0 0.0
  %408 = vmatpush1.msra.mxu0 0.0
  %409 = vmatprep.subr.mxu0 0.0
  %410 = vmatpush1.msra.mxu0 0.0
  %411 = vmatprep.subr.mxu0 0.0
  %412 = vmatpush1.msra.mxu0 0.0
  %413 = vmatprep.subr.mxu0 0.0
  %414 = vmatpush1.msra.mxu0 0.0
  %415 = vmatprep.subr.mxu0 0.0
  %416 = vmatpush1.msra.mxu0 0.0
  %417 = vmatprep.subr.mxu0 0.0
  %418 = vmatpush1.msra.mxu0 0.0
  %419 = vmatprep.subr.mxu0 0.0
  %420 = vmatpush1.msra.mxu0 0.0
  %421 = vmatprep.subr.mxu0 0.0
  %422 = vmatpush1.msra.mxu0 0.0
  %423 = vmatprep.subr.mxu0 0.0
  %424 = vmatpush1.msra.mxu0 0.0
  %425 = vmatprep.subr.mxu0 0.0
  %426 = vmatpush1.msra.mxu0 0.0
  %427 = vmatprep.subr.mxu0 0.0
  %428 = vmatpush1.msra.mxu0 0.0
  %429 = vmatprep.subr.mxu0 0.0
  %430 = vmatpush1.msra.mxu0 0.0
  %431 = vmatprep.subr.mxu0 0.0
  %432 = vmatpush1.msra.mxu0 0.0
  %433 = vmatprep.subr.mxu0 0.0
  %434 = vmatpush1.msra.mxu0 0.0
  %435 = vmatprep.subr.mxu0 0.0
  %436 = vmatpush1.msra.mxu0 0.0
  %437 = vmatprep.subr.mxu0 0.0
  %438 = vmatpush1.msra.mxu0 0.0
  %439 = vmatprep.subr.mxu0 0.0
  %440 = vmatpush1.msra.mxu0 0.0
  %441 = vmatprep.subr.mxu0 0.0
  %442 = vmatpush1.msra.mxu0 0.0
  %443 = vmatprep.subr.mxu0 0.0
  %444 = vmatpush1.msra.mxu0 0.0
  %445 = vmatprep.subr.mxu0 0.0
  %446 = vmatpush1.msra.mxu0 0.0
  %447 = vmatprep.subr.mxu0 0.0
  %448 = vmatpush1.msra.mxu0 0.0
  %449 = vmatprep.subr.mxu0 0.0
  %450 = vmatpush1.msra.mxu0 0.0
  %451 = vmatprep.mubr.f32.mxu0 0.0
  %452 = vmatmul.mubr.f32.gmra.mrb[0].mxu0 %v385
  %v453 = vpop.f32.mrb[0].mxu0
  %v454 = vadd.f32 %v379, %v453
  %v455 = vpop.f32.mrb[0].mxu0
  %456 = vdwg.mxu0
  %v457 = vld [vmem:[%s12] sm:$0xff]
  %v460 = vsel %vm108, %v301, %v294
  %v461 = vsel %vm287, %v460, 0
  %463 = vmatprep.subr.mxu0 0.0
  %464 = vmatpush1.msra.mxu0 %v457
  %465 = vmatprep.subr.mxu0 0.0
  %466 = vmatpush1.msra.mxu0 0.0
  %467 = vmatprep.subr.mxu0 0.0
  %468 = vmatpush1.msra.mxu0 0.0
  %469 = vmatprep.subr.mxu0 0.0
  %470 = vmatpush1.msra.mxu0 0.0
  %471 = vmatprep.subr.mxu0 0.0
  %472 = vmatpush1.msra.mxu0 0.0
  %473 = vmatprep.subr.mxu0 0.0
  %474 = vmatpush1.msra.mxu0 0.0
  %475 = vmatprep.subr.mxu0 0.0
  %476 = vmatpush1.msra.mxu0 0.0
  %477 = vmatprep.subr.mxu0 0.0
  %478 = vmatpush1.msra.mxu0 0.0
  %479 = vmatprep.subr.mxu0 0.0
  %480 = vmatpush1.msra.mxu0 0.0
  %481 = vmatprep.subr.mxu0 0.0
  %482 = vmatpush1.msra.mxu0 0.0
  %483 = vmatprep.subr.mxu0 0.0
  %484 = vmatpush1.msra.mxu0 0.0
  %485 = vmatprep.subr.mxu0 0.0
  %486 = vmatpush1.msra.mxu0 0.0
  %487 = vmatprep.subr.mxu0 0.0
  %488 = vmatpush1.msra.mxu0 0.0
  %489 = vmatprep.subr.mxu0 0.0
  %490 = vmatpush1.msra.mxu0 0.0
  %491 = vmatprep.subr.mxu0 0.0
  %492 = vmatpush1.msra.mxu0 0.0
  %493 = vmatprep.subr.mxu0 0.0
  %494 = vmatpush1.msra.mxu0 0.0
  %495 = vmatprep.subr.mxu0 0.0
  %496 = vmatpush1.msra.mxu0 0.0
  %497 = vmatprep.subr.mxu0 0.0
  %498 = vmatpush1.msra.mxu0 0.0
  %499 = vmatprep.subr.mxu0 0.0
  %500 = vmatpush1.msra.mxu0 0.0
  %501 = vmatprep.subr.mxu0 0.0
  %502 = vmatpush1.msra.mxu0 0.0
  %503 = vmatprep.subr.mxu0 0.0
  %504 = vmatpush1.msra.mxu0 0.0
  %505 = vmatprep.subr.mxu0 0.0
  %506 = vmatpush1.msra.mxu0 0.0
  %507 = vmatprep.subr.mxu0 0.0
  %508 = vmatpush1.msra.mxu0 0.0
  %509 = vmatprep.subr.mxu0 0.0
  %510 = vmatpush1.msra.mxu0 0.0
  %511 = vmatprep.subr.mxu0 0.0
  %512 = vmatpush1.msra.mxu0 0.0
  %513 = vmatprep.subr.mxu0 0.0
  %514 = vmatpush1.msra.mxu0 0.0
  %515 = vmatprep.subr.mxu0 0.0
  %516 = vmatpush1.msra.mxu0 0.0
  %517 = vmatprep.subr.mxu0 0.0
  %518 = vmatpush1.msra.mxu0 0.0
  %519 = vmatprep.subr.mxu0 0.0
  %520 = vmatpush1.msra.mxu0 0.0
  %521 = vmatprep.subr.mxu0 0.0
  %522 = vmatpush1.msra.mxu0 0.0
  %523 = vmatprep.subr.mxu0 0.0
  %524 = vmatpush1.msra.mxu0 0.0
  %525 = vmatprep.subr.mxu0 0.0
  %526 = vmatpush1.msra.mxu0 0.0
  %527 = vmatprep.mubr.f32.mxu0 0.0
  %528 = vmatmul.mubr.f32.gmra.mrb[0].mxu0 %v461
  %v529 = vpop.f32.mrb[0].mxu0
  %v530 = vadd.f32 0.0, %v529
  %v531 = vpop.f32.mrb[0].mxu0
  %532 = vdwg.mxu0
  %v533 = vadd.f32 %v454, %v530
  %v534 = vld [vmem:[%s13] sm:$0xff]
  %v535 = vld [vmem:[%s13 + $0x8] sm:$0xff]
  %v536 = vld [vmem:[%s13 + $0x10] sm:$0xff]
  %v537 = vld [vmem:[%s13 + $0x18] sm:$0xff]
  %v538 = vsel %vm87, %v47, 0
  %540 = vmatprep.subr.mxu0 0.0
  %541 = vmatpush1.msra.mxu0 %v534
  %542 = vmatprep.subr.mxu0 0.0
  %543 = vmatpush1.msra.mxu0 %v535
  %544 = vmatprep.subr.mxu0 0.0
  %545 = vmatpush1.msra.mxu0 %v536
  %546 = vmatprep.subr.mxu0 0.0
  %547 = vmatpush1.msra.mxu0 %v537
  %548 = vmatprep.subr.mxu0 0.0
  %549 = vmatpush1.msra.mxu0 0.0
  %550 = vmatprep.subr.mxu0 0.0
  %551 = vmatpush1.msra.mxu0 0.0
  %552 = vmatprep.subr.mxu0 0.0
  %553 = vmatpush1.msra.mxu0 0.0
  %554 = vmatprep.subr.mxu0 0.0
  %555 = vmatpush1.msra.mxu0 0.0
  %556 = vmatprep.subr.mxu0 0.0
  %557 = vmatpush1.msra.mxu0 0.0
  %558 = vmatprep.subr.mxu0 0.0
  %559 = vmatpush1.msra.mxu0 0.0
  %560 = vmatprep.subr.mxu0 0.0
  %561 = vmatpush1.msra.mxu0 0.0
  %562 = vmatprep.subr.mxu0 0.0
  %563 = vmatpush1.msra.mxu0 0.0
  %564 = vmatprep.subr.mxu0 0.0
  %565 = vmatpush1.msra.mxu0 0.0
  %566 = vmatprep.subr.mxu0 0.0
  %567 = vmatpush1.msra.mxu0 0.0
  %568 = vmatprep.subr.mxu0 0.0
  %569 = vmatpush1.msra.mxu0 0.0
  %570 = vmatprep.subr.mxu0 0.0
  %571 = vmatpush1.msra.mxu0 0.0
  %572 = vmatprep.subr.mxu0 0.0
  %573 = vmatpush1.msra.mxu0 0.0
  %574 = vmatprep.subr.mxu0 0.0
  %575 = vmatpush1.msra.mxu0 0.0
  %576 = vmatprep.subr.mxu0 0.0
  %577 = vmatpush1.msra.mxu0 0.0
  %578 = vmatprep.subr.mxu0 0.0
  %579 = vmatpush1.msra.mxu0 0.0
  %580 = vmatprep.subr.mxu0 0.0
  %581 = vmatpush1.msra.mxu0 0.0
  %582 = vmatprep.subr.mxu0 0.0
  %583 = vmatpush1.msra.mxu0 0.0
  %584 = vmatprep.subr.mxu0 0.0
  %585 = vmatpush1.msra.mxu0 0.0
  %586 = vmatprep.subr.mxu0 0.0
  %587 = vmatpush1.msra.mxu0 0.0
  %588 = vmatprep.subr.mxu0 0.0
  %589 = vmatpush1.msra.mxu0 0.0
  %590 = vmatprep.subr.mxu0 0.0
  %591 = vmatpush1.msra.mxu0 0.0
  %592 = vmatprep.subr.mxu0 0.0
  %593 = vmatpush1.msra.mxu0 0.0
  %594 = vmatprep.subr.mxu0 0.0
  %595 = vmatpush1.msra.mxu0 0.0
  %596 = vmatprep.subr.mxu0 0.0
  %597 = vmatpush1.msra.mxu0 0.0
  %598 = vmatprep.subr.mxu0 0.0
  %599 = vmatpush1.msra.mxu0 0.0
  %600 = vmatprep.subr.mxu0 0.0
  %601 = vmatpush1.msra.mxu0 0.0
  %602 = vmatprep.subr.mxu0 0.0
  %603 = vmatpush1.msra.mxu0 0.0
  %604 = vmatprep.mubr.f32.mxu0 0.0
  %605 = vmatmul.mubr.f32.gmra.mrb[0].mxu0 %v538
  %v606 = vpop.f32.mrb[0].mxu0
  %v607 = vadd.f32 0.0, %v606
  %v608 = vpop.f32.mrb[0].mxu0
  %609 = vdwg.mxu0
  %v610 = vadd.f32 %v533, %v607
  %v611 = vtanh.pop %v610
  %vm612 = vcmask 254976
  %613 = vst.msk [vmem:[%s14] sm:$0x3] %vm612, %v611
  %615 = vrot.lane.b32.xlu0 %v126, 32
  %v616 = vpop.permute.xlu0 %615
  %vm618 = vcmask 320768
  %619 = vst.msk [vmem:[%s14] sm:$0x3] %vm618, %v616
  %621 = vrot.lane.b32.xlu0 %v198, 40
  %v622 = vpop.permute.xlu0 %621
  %vm624 = vcmask 386368
  %625 = vst.msk [vmem:[%s14] sm:$0x3] %vm624, %v622
  %627 = vrot.lane.b32.xlu0 %v270, 48
  %v628 = vpop.permute.xlu0 %627
  %vm630 = vcmask 451968
  %631 = vst.msk [vmem:[%s14] sm:$0x3] %vm630, %v628
  %vm632 = vcmask 1041856
  %633 = vst.msk [vmem:[%s14] sm:$0x3] %vm632, 0.0
  // Predicated region
  $region58: #{both_attention.1} parent=0 // pred_check
    _
  $region59: #{both_attention.1} parent=0 // pred_check_branch
    %635 = sbr.rel (0) target = $region61
  $region60: #{both_attention.1} parent=0 // pred_region
    _
  $region61: #{both_attention.1} parent=0 // pred_fallthru
    _
  // Predicated region
  $region62: #{both_attention.1} parent=0 // pred_check
    _
  $region63: #{both_attention.1} parent=0 // pred_check_branch
    %637 = sbr.rel (0) target = $region65
  $region64: #{both_attention.1} parent=0 // pred_region
    _
  $region65: #{both_attention.1} parent=0 // pred_fallthru
    _

</llo_original>
